<compile_context>
chip_gen: v7x
topology: tpu7x:2x2x1
jax: 0.10.0
libtpu: 0.0.40
codegen_flags: <defaults>
</compile_context>

<pallas_src>
import jax
import jax.numpy as jnp
from jax.experimental import pallas as pl
from jax.experimental.pallas import tpu as pltpu

HIDDEN = 256


def _qfunc_kernel(obs_ref, act_ref, w1o_ref, w1a_ref, b1_ref,
                  w2_ref, b2_ref, w3_ref, b3_ref, w4_ref, b4_ref, o_ref):
    wdt = w2_ref.dtype  # matmul operand dtype (bf16 by default); f32 accumulate

    # Layer 1: split-K matmul over [obs | act] (no wrapper-side concat/pad,
    # no wrapper-side f32 upcast -- operands are cast in-VMEM).
    h = jnp.dot(obs_ref[...].astype(wdt), w1o_ref[...],
                preferred_element_type=jnp.float32)
    h = h + jnp.dot(act_ref[...].astype(wdt), w1a_ref[...],
                    preferred_element_type=jnp.float32)
    h = jnp.maximum(h + b1_ref[...], 0.0)

    # Layer 2: (tile_b, 256) @ (256, 256) -> ReLU
    h = jnp.dot(h.astype(wdt), w2_ref[...], preferred_element_type=jnp.float32)
    h = jnp.maximum(h + b2_ref[...], 0.0)

    # Layer 3: (tile_b, 256) @ (256, 256) -> ReLU
    h = jnp.dot(h.astype(wdt), w3_ref[...], preferred_element_type=jnp.float32)
    h = jnp.maximum(h + b3_ref[...], 0.0)

    # Head (256 -> 1): VPU multiply + XLU lane reduction instead of an N=1 MXU
    # matmul.  Scalar bias (SMEM) and cast are applied before the relayout so
    # only one narrow (tile_b,) -> (1, tile_b) transpose is emitted; the result
    # is stored lane-dense with the batch on the 128-lane axis.
    q = jnp.sum(h * w4_ref[...], axis=-1) + b4_ref[0, 0]        # (tile_b,) f32
    o_ref[...] = q[None, :].astype(o_ref.dtype)                 # (1, tile_b)


def _round_up(x: int, m: int) -> int:
    return ((x + m - 1) // m) * m


def _tile_cap() -> int:
    """Per-generation batch-tile cap: v5e's MXU is ~4.7x slower, so compute
    covers the fixed per-step overhead at a smaller tile there."""
    try:
        kind = jax.devices()[0].device_kind.lower()
    except Exception:
        return 1024
    if ("v5 lite" in kind) or ("v5e" in kind) or ("v5lite" in kind):
        return 512
    return 1024


def _pick_tile(batch: int) -> int:
    """Shape-derived batch tile (static).

    * batch <= 256: one tile (rounded up to the 8-row sublane granule).
    * batch  > 256: target ~batch/2 so the grid keeps >= 2 steps (lets v7x's
      two TensorCores split the batch axis), rounded to a multiple of 128 so
      the lane-dense (1, tile_b) output block stays unmasked, capped per
      generation (512 on v5e, 1024 otherwise).
    """
    if batch <= 256:
        return _round_up(max(batch, 1), 8)
    return max(128, min(_tile_cap(), _round_up(pl.cdiv(batch, 2), 128)))


def init_params(key, observation_dim: int, action_dim: int):
    """f32 parameters mimicking the PyTorch module's shapes & init
    (orthogonal_init=False): nn.Linear default U(-1/sqrt(fan_in), +) for the
    hidden layers, xavier_uniform_(gain=0.01) weight + zero bias for the head.
    Weights are stored (in, out) — transposed w.r.t. torch's (out, in) — with
    W1 split into its obs / act row blocks and W4 stored as a (1, 256) row.
    """
    keys = jax.random.split(key, 4)
    d_in = observation_dim + action_dim

    def lin_init(k, fan_in, fan_out):
        bound = 1.0 / float(fan_in) ** 0.5
        kw, kb = jax.random.split(k)
        w = jax.random.uniform(kw, (fan_in, fan_out), jnp.float32, -bound, bound)
        b = jax.random.uniform(kb, (1, fan_out), jnp.float32, -bound, bound)
        return w, b

    w1, b1 = lin_init(keys[0], d_in, HIDDEN)
    w2, b2 = lin_init(keys[1], HIDDEN, HIDDEN)
    w3, b3 = lin_init(keys[2], HIDDEN, HIDDEN)
    limit = 0.01 * (6.0 / (HIDDEN + 1)) ** 0.5           # xavier_uniform, gain=0.01
    w4 = jax.random.uniform(keys[3], (1, HIDDEN), jnp.float32, -limit, limit)
    b4 = jnp.zeros((1, 1), jnp.float32)
    return (w1[:observation_dim], w1[observation_dim:], b1, w2, b2, w3, b3, w4, b4)


def to_kernel_params(params, weight_dtype=jnp.bfloat16):
    """Cast the matmul weights to the (bf16) MXU operand dtype; biases and the
    head row stay f32 (deliberate accuracy/throughput trade; accumulation f32)."""
    w1o, w1a, b1, w2, b2, w3, b3, w4, b4 = params
    return (w1o.astype(weight_dtype), w1a.astype(weight_dtype), b1,
            w2.astype(weight_dtype), b2, w3.astype(weight_dtype), b3, w4, b4)


@jax.jit
def q_function_forward(observations, actions, params):
    """Pallas forward pass: returns q-values of shape (B,)."""
    w1o, w1a, b1, w2, b2, w3, b3, w4, b4 = params
    B, obs_dim = observations.shape
    act_dim = actions.shape[1]

    tile_b = _pick_tile(B)             # static (shape-derived)
    num_tiles = pl.cdiv(B, tile_b)     # partial last tile handled by Pallas
    const2 = lambda i: (0, 0)          # weights/biases: resident across steps

    out = pl.pallas_call(
        _qfunc_kernel,
        out_shape=jax.ShapeDtypeStruct((1, num_tiles * tile_b), jnp.float32),
        grid=(num_tiles,),
        in_specs=[
            pl.BlockSpec((tile_b, obs_dim), lambda i: (i, 0)),   # obs tile
            pl.BlockSpec((tile_b, act_dim), lambda i: (i, 0)),   # act tile
            pl.BlockSpec((obs_dim, HIDDEN), const2),             # W1[:obs_dim]
            pl.BlockSpec((act_dim, HIDDEN), const2),             # W1[obs_dim:]
            pl.BlockSpec((1, HIDDEN), const2),                   # b1
            pl.BlockSpec((HIDDEN, HIDDEN), const2),              # W2
            pl.BlockSpec((1, HIDDEN), const2),                   # b2
            pl.BlockSpec((HIDDEN, HIDDEN), const2),              # W3
            pl.BlockSpec((1, HIDDEN), const2),                   # b3
            pl.BlockSpec((1, HIDDEN), const2),                   # W4 row (f32)
            pl.BlockSpec(memory_space=pltpu.SMEM),               # b4 scalar
        ],
        out_specs=pl.BlockSpec((1, tile_b), lambda i: (0, i)),   # lane-dense q
        compiler_params=pltpu.CompilerParams(
            dimension_semantics=("parallel",),
            vmem_limit_bytes=32 * 1024 * 1024),
    )(observations, actions, w1o, w1a, b1, w2, b2, w3, b3, w4, b4)
    return out[0, :B]


def q_function_ref(observations, actions, params):
    """Pure-JAX reference.  With f32 params this is the original module math;
    with to_kernel_params(...) it mirrors the bf16-operand kernel math."""
    w1o, w1a, b1, w2, b2, w3, b3, w4, b4 = params
    wdt = w2.dtype
    h = (jnp.dot(observations.astype(wdt), w1o, preferred_element_type=jnp.float32)
         + jnp.dot(actions.astype(wdt), w1a, preferred_element_type=jnp.float32))
    h = jnp.maximum(h + b1, 0.0)
    h = jnp.maximum(
        jnp.dot(h.astype(wdt), w2, preferred_element_type=jnp.float32) + b2, 0.0)
    h = jnp.maximum(
        jnp.dot(h.astype(wdt), w3, preferred_element_type=jnp.float32) + b3, 0.0)
    return jnp.sum(h * w4.astype(jnp.float32), axis=-1) + b4[0, 0]


if __name__ == "__main__":
    OBS_DIM, ACT_DIM = 17, 6   # HalfCheetah-like dims

    key = jax.random.PRNGKey(0)
    k_params, k_obs, k_act = jax.random.split(key, 3)
    params_f32 = init_params(k_params, OBS_DIM, ACT_DIM)
    params = to_kernel_params(params_f32)          # bf16 matmul weights

    # Small single-tile check (B=8, grid=1).
    B = 8
    obs = jax.random.normal(k_obs, (B, OBS_DIM), jnp.float32)
    act = jax.random.uniform(k_act, (B, ACT_DIM), jnp.float32, -1.0, 1.0)
    q = jax.block_until_ready(q_function_forward(obs, act, params))
    q_ref = q_function_ref(obs, act, params)
    assert q.shape == (B,)
    assert jnp.allclose(q, q_ref, atol=1e-4, rtol=1e-3), (q, q_ref)

    # Gridded check: 2 tiles of 256 with a partial last tile (B=300).
    B2 = 300
    obs2 = jax.random.normal(k_obs, (B2, OBS_DIM), jnp.float32)
    act2 = jax.random.uniform(k_act, (B2, ACT_DIM), jnp.float32, -1.0, 1.0)
    q2 = jax.block_until_ready(q_function_forward(obs2, act2, params))
    q2_ref = q_function_ref(obs2, act2, params)
    assert q2.shape == (B2,)
    assert jnp.allclose(q2, q2_ref, atol=1e-4, rtol=1e-3), (q2, q2_ref)

    # Quantify bf16-weight drift against the original f32 module math
    # (loose tolerance; Q-values here are O(1e-3), drift is O(1e-5)).
    q2_f32 = q_function_ref(obs2, act2, params_f32)
    assert jnp.allclose(q2, q2_f32, atol=1e-4, rtol=2e-2), (q2, q2_f32)

    print("KERNEL_OK")
</pallas_src>

<mosaic_0001>
module attributes {stable_mosaic.version = 11 : i64} {
  func.func @_qfunc_kernel(%arg0: i32, %arg1: memref<8x17xf32, #tpu.memory_space<vmem>>, %arg2: memref<8x6xf32, #tpu.memory_space<vmem>>, %arg3: memref<17x256xbf16, #tpu.memory_space<vmem>>, %arg4: memref<6x256xbf16, #tpu.memory_space<vmem>>, %arg5: memref<1x256xf32, #tpu.memory_space<vmem>>, %arg6: memref<256x256xbf16, #tpu.memory_space<vmem>>, %arg7: memref<1x256xf32, #tpu.memory_space<vmem>>, %arg8: memref<256x256xbf16, #tpu.memory_space<vmem>>, %arg9: memref<1x256xf32, #tpu.memory_space<vmem>>, %arg10: memref<1x256xf32, #tpu.memory_space<vmem>>, %arg11: memref<1x1xf32, #tpu.memory_space<smem>>, %arg12: memref<1x8xf32, #tpu.memory_space<vmem>>) attributes {dimension_semantics = [#tpu.dimension_semantics<parallel>], iteration_bounds = array<i64: 1>, scalar_prefetch = 0 : i64, scratch_operands = 0 : i64, tpu.core_type = #tpu.core_type<tc>, window_params = [{transform_indices = @transform_0, window_bounds = array<i64: 8, 17>}, {transform_indices = @transform_1, window_bounds = array<i64: 8, 6>}, {pipeline_mode = #tpu.pipeline_mode<synchronous>, transform_indices = @transform_2, window_bounds = array<i64: 17, 256>}, {pipeline_mode = #tpu.pipeline_mode<synchronous>, transform_indices = @transform_3, window_bounds = array<i64: 6, 256>}, {pipeline_mode = #tpu.pipeline_mode<synchronous>, transform_indices = @transform_4, window_bounds = array<i64: 1, 256>}, {pipeline_mode = #tpu.pipeline_mode<synchronous>, transform_indices = @transform_5, window_bounds = array<i64: 256, 256>}, {pipeline_mode = #tpu.pipeline_mode<synchronous>, transform_indices = @transform_6, window_bounds = array<i64: 1, 256>}, {pipeline_mode = #tpu.pipeline_mode<synchronous>, transform_indices = @transform_7, window_bounds = array<i64: 256, 256>}, {pipeline_mode = #tpu.pipeline_mode<synchronous>, transform_indices = @transform_8, window_bounds = array<i64: 1, 256>}, {pipeline_mode = #tpu.pipeline_mode<synchronous>, transform_indices = @transform_9, window_bounds = array<i64: 1, 256>}, {transform_indices = @transform_10, window_bounds = array<i64: 1, 1>}, {transform_indices = @transform_11, window_bounds = array<i64: 1, 8>}]} {
    %c0 = arith.constant 0 : index
    %c0_0 = arith.constant 0 : index
    %0 = vector.load %arg1[%c0, %c0_0] : memref<8x17xf32, #tpu.memory_space<vmem>>, vector<8x17xf32>
    %1 = arith.truncf %0 : vector<8x17xf32> to vector<8x17xbf16>
    %c0_1 = arith.constant 0 : index
    %c0_2 = arith.constant 0 : index
    %2 = vector.load %arg3[%c0_1, %c0_2] : memref<17x256xbf16, #tpu.memory_space<vmem>>, vector<17x256xbf16>
    %cst = arith.constant dense<0.000000e+00> : vector<8x256xf32>
    %3 = tpu.matmul %1, %2, %cst {dimension_numbers = #tpu.dot_dimension_numbers<[1], [0], [0], [1], [0, 0, 1, 1], [], []>} : vector<8x17xbf16>, vector<17x256xbf16>, vector<8x256xf32> -> vector<8x256xf32>
    %c0_3 = arith.constant 0 : index
    %c0_4 = arith.constant 0 : index
    %4 = vector.load %arg2[%c0_3, %c0_4] : memref<8x6xf32, #tpu.memory_space<vmem>>, vector<8x6xf32>
    %5 = arith.truncf %4 : vector<8x6xf32> to vector<8x6xbf16>
    %c0_5 = arith.constant 0 : index
    %c0_6 = arith.constant 0 : index
    %6 = vector.load %arg4[%c0_5, %c0_6] : memref<6x256xbf16, #tpu.memory_space<vmem>>, vector<6x256xbf16>
    %cst_7 = arith.constant dense<0.000000e+00> : vector<8x256xf32>
    %7 = tpu.matmul %5, %6, %cst_7 {dimension_numbers = #tpu.dot_dimension_numbers<[1], [0], [0], [1], [0, 0, 1, 1], [], []>} : vector<8x6xbf16>, vector<6x256xbf16>, vector<8x256xf32> -> vector<8x256xf32>
    %8 = arith.addf %3, %7 : vector<8x256xf32>
    %c0_8 = arith.constant 0 : index
    %c0_9 = arith.constant 0 : index
    %9 = vector.load %arg5[%c0_8, %c0_9] : memref<1x256xf32, #tpu.memory_space<vmem>>, vector<1x256xf32>
    %10 = vector.broadcast %9 : vector<1x256xf32> to vector<8x256xf32>
    %11 = arith.addf %8, %10 : vector<8x256xf32>
    %cst_10 = arith.constant 0.000000e+00 : f32
    %12 = vector.broadcast %cst_10 : f32 to vector<8x256xf32>
    %13 = arith.maximumf %11, %12 : vector<8x256xf32>
    %14 = arith.truncf %13 : vector<8x256xf32> to vector<8x256xbf16>
    %c0_11 = arith.constant 0 : index
    %c0_12 = arith.constant 0 : index
    %15 = vector.load %arg6[%c0_11, %c0_12] : memref<256x256xbf16, #tpu.memory_space<vmem>>, vector<256x256xbf16>
    %cst_13 = arith.constant dense<0.000000e+00> : vector<8x256xf32>
    %16 = tpu.matmul %14, %15, %cst_13 {dimension_numbers = #tpu.dot_dimension_numbers<[1], [0], [0], [1], [0, 0, 1, 1], [], []>} : vector<8x256xbf16>, vector<256x256xbf16>, vector<8x256xf32> -> vector<8x256xf32>
    %c0_14 = arith.constant 0 : index
    %c0_15 = arith.constant 0 : index
    %17 = vector.load %arg7[%c0_14, %c0_15] : memref<1x256xf32, #tpu.memory_space<vmem>>, vector<1x256xf32>
    %18 = vector.broadcast %17 : vector<1x256xf32> to vector<8x256xf32>
    %19 = arith.addf %16, %18 : vector<8x256xf32>
    %cst_16 = arith.constant 0.000000e+00 : f32
    %20 = vector.broadcast %cst_16 : f32 to vector<8x256xf32>
    %21 = arith.maximumf %19, %20 : vector<8x256xf32>
    %22 = arith.truncf %21 : vector<8x256xf32> to vector<8x256xbf16>
    %c0_17 = arith.constant 0 : index
    %c0_18 = arith.constant 0 : index
    %23 = vector.load %arg8[%c0_17, %c0_18] : memref<256x256xbf16, #tpu.memory_space<vmem>>, vector<256x256xbf16>
    %cst_19 = arith.constant dense<0.000000e+00> : vector<8x256xf32>
    %24 = tpu.matmul %22, %23, %cst_19 {dimension_numbers = #tpu.dot_dimension_numbers<[1], [0], [0], [1], [0, 0, 1, 1], [], []>} : vector<8x256xbf16>, vector<256x256xbf16>, vector<8x256xf32> -> vector<8x256xf32>
    %c0_20 = arith.constant 0 : index
    %c0_21 = arith.constant 0 : index
    %25 = vector.load %arg9[%c0_20, %c0_21] : memref<1x256xf32, #tpu.memory_space<vmem>>, vector<1x256xf32>
    %26 = vector.broadcast %25 : vector<1x256xf32> to vector<8x256xf32>
    %27 = arith.addf %24, %26 : vector<8x256xf32>
    %cst_22 = arith.constant 0.000000e+00 : f32
    %28 = vector.broadcast %cst_22 : f32 to vector<8x256xf32>
    %29 = arith.maximumf %27, %28 : vector<8x256xf32>
    %c0_23 = arith.constant 0 : index
    %c0_24 = arith.constant 0 : index
    %30 = vector.load %arg10[%c0_23, %c0_24] : memref<1x256xf32, #tpu.memory_space<vmem>>, vector<1x256xf32>
    %31 = vector.broadcast %30 : vector<1x256xf32> to vector<8x256xf32>
    %32 = arith.mulf %29, %31 : vector<8x256xf32>
    %cst_25 = arith.constant dense<0.000000e+00> : vector<8xf32>
    %33 = vector.multi_reduction <add>, %32, %cst_25 [1] : vector<8x256xf32> to vector<8xf32>
    %c0_26 = arith.constant 0 : index
    %c0_27 = arith.constant 0 : index
    %34 = memref.load %arg11[%c0_26, %c0_27] : memref<1x1xf32, #tpu.memory_space<smem>>
    %35 = vector.broadcast %34 : f32 to vector<8xf32>
    %36 = arith.addf %33, %35 : vector<8xf32>
    %37 = vector.shape_cast %36 : vector<8xf32> to vector<1x8xf32>
    %c0_28 = arith.constant 0 : index
    %c0_29 = arith.constant 0 : index
    %38 = vector.load %arg12[%c0_28, %c0_29] : memref<1x8xf32, #tpu.memory_space<vmem>>, vector<1x8xf32>
    tpu.vector_store %arg12[%c0_28, %c0_29], %37 {strides = array<i32>} : memref<1x8xf32, #tpu.memory_space<vmem>>, vector<1x8xf32>,
    return
  }
  func.func @transform_0(%arg0: i32) -> (i32, i32) {
    %c0_i32 = arith.constant 0 : i32
    %c0_i32_0 = arith.constant 0 : i32
    return %arg0, %c0_i32 : i32, i32
  }
  func.func @transform_1(%arg0: i32) -> (i32, i32) {
    %c0_i32 = arith.constant 0 : i32
    %c0_i32_0 = arith.constant 0 : i32
    return %arg0, %c0_i32 : i32, i32
  }
  func.func @transform_2(%arg0: i32) -> (i32, i32) {
    %c0_i32 = arith.constant 0 : i32
    %c0_i32_0 = arith.constant 0 : i32
    %c0_i32_1 = arith.constant 0 : i32
    return %c0_i32, %c0_i32_0 : i32, i32
  }
  func.func @transform_3(%arg0: i32) -> (i32, i32) {
    %c0_i32 = arith.constant 0 : i32
    %c0_i32_0 = arith.constant 0 : i32
    %c0_i32_1 = arith.constant 0 : i32
    return %c0_i32, %c0_i32_0 : i32, i32
  }
  func.func @transform_4(%arg0: i32) -> (i32, i32) {
    %c0_i32 = arith.constant 0 : i32
    %c0_i32_0 = arith.constant 0 : i32
    %c0_i32_1 = arith.constant 0 : i32
    return %c0_i32, %c0_i32_0 : i32, i32
  }
  func.func @transform_5(%arg0: i32) -> (i32, i32) {
    %c0_i32 = arith.constant 0 : i32
    %c0_i32_0 = arith.constant 0 : i32
    %c0_i32_1 = arith.constant 0 : i32
    return %c0_i32, %c0_i32_0 : i32, i32
  }
  func.func @transform_6(%arg0: i32) -> (i32, i32) {
    %c0_i32 = arith.constant 0 : i32
    %c0_i32_0 = arith.constant 0 : i32
    %c0_i32_1 = arith.constant 0 : i32
    return %c0_i32, %c0_i32_0 : i32, i32
  }
  func.func @transform_7(%arg0: i32) -> (i32, i32) {
    %c0_i32 = arith.constant 0 : i32
    %c0_i32_0 = arith.constant 0 : i32
    %c0_i32_1 = arith.constant 0 : i32
    return %c0_i32, %c0_i32_0 : i32, i32
  }
  func.func @transform_8(%arg0: i32) -> (i32, i32) {
    %c0_i32 = arith.constant 0 : i32
    %c0_i32_0 = arith.constant 0 : i32
    %c0_i32_1 = arith.constant 0 : i32
    return %c0_i32, %c0_i32_0 : i32, i32
  }
  func.func @transform_9(%arg0: i32) -> (i32, i32) {
    %c0_i32 = arith.constant 0 : i32
    %c0_i32_0 = arith.constant 0 : i32
    %c0_i32_1 = arith.constant 0 : i32
    return %c0_i32, %c0_i32_0 : i32, i32
  }
  func.func @transform_10(%arg0: i32) -> (i32, i32) {
    %c0_i32 = arith.constant 0 : i32
    %c0_i32_0 = arith.constant 0 : i32
    %c0_i32_1 = arith.constant 0 : i32
    return %c0_i32, %c0_i32_0 : i32, i32
  }
  func.func @transform_11(%arg0: i32) -> (i32, i32) {
    %c0_i32 = arith.constant 0 : i32
    %c0_i32_0 = arith.constant 0 : i32
    return %c0_i32, %arg0 : i32, i32
  }
}

</mosaic_0001>

<llo_original>
// kernel: q_function_forward.1
$region0: #{q_function_forward.1}
  #allocation0 [shape = 'u32[]', space=smem, size = 0x4, offset = 0x4, fixed_abs, tag = 'smem constant byte address 0x4 - core index']
  #allocation1 [shape = 'u32[144,128]{1,0:T(1,128)}', space=vmem, size = 0x12000, scoped, tag = 'internal scratch']
  #allocation2 [shape = 'f32[1,1]{1,0:T(1,128)S(6)}', space=smem, size = 0x200, scoped, tag = 'scoped memory for q_function_forward.1']
  %s0 = inlined_call_operand.hbm [shape: f32[8,17], index: 0, kind: input, shape index: {}]
  %s1 = inlined_call_operand.hbm [shape: f32[8,6], index: 1, kind: input, shape index: {}]
  %s2 = inlined_call_operand.hbm [shape: bf16[17,256], index: 2, kind: input, shape index: {}]
  %s3 = inlined_call_operand.vmem [shape: bf16[6,256], index: 3, kind: input, shape index: {}]
  %s4 = inlined_call_operand.vmem [shape: f32[1,256], index: 4, kind: input, shape index: {}]
  %s5 = inlined_call_operand.hbm [shape: bf16[256,256], index: 5, kind: input, shape index: {}]
  %s6 = inlined_call_operand.vmem [shape: f32[1,256], index: 6, kind: input, shape index: {}]
  %s7 = inlined_call_operand.hbm [shape: bf16[256,256], index: 7, kind: input, shape index: {}]
  %s8 = inlined_call_operand.vmem [shape: f32[1,256], index: 8, kind: input, shape index: {}]
  %s9 = inlined_call_operand.vmem [shape: f32[1,256], index: 9, kind: input, shape index: {}]
  %s10 = inlined_call_operand.<no memory space> [shape: f32[1,1], index: 10, kind: input, shape index: {}]
  %s11 = inlined_call_operand.hbm [shape: f32[1,8], index: 11, kind: output, shape index: {}]
  %s12 = sld [smem:[#allocation0]]
  $region74: #{q_function_forward.1} parent=0
    _
  %s14 = ssub.s32 1, %s12
  %s15 = scalar_select 0, %s14, %s12
  %16 = sst [smem:[#allocation2]] %s10
  $region1: #{q_function_forward.1} parent=0
    #allocation3 [shape = 'u8[4096]{0}', space=vmem, size = 0x1000, scoped, tag = 'input window, operand 0, single buffered']
    #allocation4 [shape = 's32[1]{0}', space=sflag, size = 0x4, scoped, tag = 'scoped memory for q_function_forward.1']
    #allocation5 [shape = 's32[1]{0}', space=sflag, size = 0x4, scoped, tag = 'scoped memory for q_function_forward.1']
    #allocation6 [shape = 'u8[4096]{0}', space=vmem, size = 0x1000, scoped, tag = 'input window, operand 1, single buffered']
    #allocation7 [shape = 's32[1]{0}', space=sflag, size = 0x4, scoped, tag = 'scoped memory for q_function_forward.1']
    #allocation8 [shape = 'u8[12288]{0}', space=vmem, size = 0x3000, scoped, tag = 'input window, operand 2, single buffered']
    #allocation9 [shape = 'u8[131072]{0}', space=vmem, size = 0x20000, scoped, tag = 'input window, operand 5, single buffered']
    #allocation10 [shape = 's32[1]{0}', space=sflag, size = 0x4, scoped, tag = 'scoped memory for q_function_forward.1']
    #allocation11 [shape = 'u8[131072]{0}', space=vmem, size = 0x20000, scoped, tag = 'input window, operand 7, single buffered']
    #allocation12 [shape = 'u8[512]{0}', space=vmem, size = 0x400, scoped, tag = 'output window, operand 0, single buffered']
    %17 = vsyncpa [#allocation4], 0
    %18 = vsyncpa [#allocation7], 0
    %19 = vsyncpa [#allocation10], 0
    %20 = vsyncpa [#allocation5], 0
    // Predicated region
    $region2: #{q_function_forward.1} parent=1 // pred_check
      _
    $region3: #{q_function_forward.1} parent=1 // pred_check_branch
      %22 = sbr.rel (0) target = $region5
    $region4: #{q_function_forward.1} parent=1 // pred_region
      %s24 = ssub.s32 128, 128
      %25 = vsyncadd [#allocation4], %s24
      %s27 = sshll.u32 [#allocation3], 4
      %s28 = int_to_ptr.vmem [resolvable:$true] %s27
      %30 = dma.hbm_to_vmem [thread:$0]  %s0, 128, %s28, [#allocation4]
    $region5: #{q_function_forward.1} parent=1 // pred_fallthru
      _
    // Predicated region
    $region6: #{q_function_forward.1} parent=1 // pred_check
      _
    $region7: #{q_function_forward.1} parent=1 // pred_check_branch
      %32 = sbr.rel (0) target = $region9
    $region8: #{q_function_forward.1} parent=1 // pred_region
      %s34 = ssub.s32 128, 128
      %35 = vsyncadd [#allocation7], %s34
      %s37 = sshll.u32 [#allocation6], 4
      %s38 = int_to_ptr.vmem [resolvable:$true] %s37
      %40 = dma.hbm_to_vmem [thread:$0]  %s1, 128, %s38, [#allocation7]
    $region9: #{q_function_forward.1} parent=1 // pred_fallthru
      _
    // Predicated region
    $region10: #{q_function_forward.1} parent=1 // pred_check
      _
    $region11: #{q_function_forward.1} parent=1 // pred_check_branch
      %42 = sbr.rel (0) target = $region13
    $region12: #{q_function_forward.1} parent=1 // pred_region
      %s44 = ssub.s32 384, 384
      %45 = vsyncadd [#allocation7], %s44
      %s46 = sshll.u32 [#allocation8], 4
      %s47 = int_to_ptr.vmem [resolvable:$true] %s46
      %52 = dma.hbm_to_vmem [thread:$0]  %s2, 384, %s47, [#allocation7], 128, 128, 8
    $region13: #{q_function_forward.1} parent=1 // pred_fallthru
      _
    // Predicated region
    $region14: #{q_function_forward.1} parent=1 // pred_check
      _
    $region15: #{q_function_forward.1} parent=1 // pred_check_branch
      %54 = sbr.rel (0) target = $region17
    $region16: #{q_function_forward.1} parent=1 // pred_region
      _
    $region17: #{q_function_forward.1} parent=1 // pred_fallthru
      _
    // Predicated region
    $region18: #{q_function_forward.1} parent=1 // pred_check
      _
    $region19: #{q_function_forward.1} parent=1 // pred_check_branch
      %56 = sbr.rel (0) target = $region21
    $region20: #{q_function_forward.1} parent=1 // pred_region
      _
    $region21: #{q_function_forward.1} parent=1 // pred_fallthru
      _
    // Predicated region
    $region22: #{q_function_forward.1} parent=1 // pred_check
      _
    $region23: #{q_function_forward.1} parent=1 // pred_check_branch
      %58 = sbr.rel (0) target = $region25
    $region24: #{q_function_forward.1} parent=1 // pred_region
      %s60 = ssub.s32 4096, 4096
      %61 = vsyncadd [#allocation10], %s60
      %s62 = sshll.u32 [#allocation9], 4
      %s63 = int_to_ptr.vmem [resolvable:$true] %s62
      %68 = dma.hbm_to_vmem [thread:$0]  %s5, 4096, %s63, [#allocation10], 128, 128, 8
    $region25: #{q_function_forward.1} parent=1 // pred_fallthru
      _
    // Predicated region
    $region26: #{q_function_forward.1} parent=1 // pred_check
      _
    $region27: #{q_function_forward.1} parent=1 // pred_check_branch
      %70 = sbr.rel (0) target = $region29
    $region28: #{q_function_forward.1} parent=1 // pred_region
      _
    $region29: #{q_function_forward.1} parent=1 // pred_fallthru
      _
    // Predicated region
    $region30: #{q_function_forward.1} parent=1 // pred_check
      _
    $region31: #{q_function_forward.1} parent=1 // pred_check_branch
      %72 = sbr.rel (0) target = $region33
    $region32: #{q_function_forward.1} parent=1 // pred_region
      %s74 = ssub.s32 4096, 4096
      %75 = vsyncadd [#allocation10], %s74
      %s76 = sshll.u32 [#allocation11], 4
      %s77 = int_to_ptr.vmem [resolvable:$true] %s76
      %82 = dma.hbm_to_vmem [thread:$0]  %s7, 4096, %s77, [#allocation10], 128, 128, 8
    $region33: #{q_function_forward.1} parent=1 // pred_fallthru
      _
    // Predicated region
    $region34: #{q_function_forward.1} parent=1 // pred_check
      _
    $region35: #{q_function_forward.1} parent=1 // pred_check_branch
      %84 = sbr.rel (0) target = $region37
    $region36: #{q_function_forward.1} parent=1 // pred_region
      _
    $region37: #{q_function_forward.1} parent=1 // pred_fallthru
      _
    // Predicated region
    $region38: #{q_function_forward.1} parent=1 // pred_check
      _
    $region39: #{q_function_forward.1} parent=1 // pred_check_branch
      %86 = sbr.rel (0) target = $region41
    $region40: #{q_function_forward.1} parent=1 // pred_region
      _
    $region41: #{q_function_forward.1} parent=1 // pred_fallthru
      _
    // Predicated region
    $region42: #{q_function_forward.1} parent=1 // pred_check
      _
    $region43: #{q_function_forward.1} parent=1 // pred_check_branch
      %88 = sbr.rel (0) target = $region45
    $region44: #{q_function_forward.1} parent=1 // pred_region
      _
    $region45: #{q_function_forward.1} parent=1 // pred_fallthru
      _
    // Predicated region
    $region46: #{q_function_forward.1} parent=1 // pred_check
      _
    $region47: #{q_function_forward.1} parent=1 // pred_check_branch
      %90 = sbr.rel (0) target = $region49
    $region48: #{q_function_forward.1} parent=1 // pred_region
      %91 = dma.done [#allocation4], 128
    $region49: #{q_function_forward.1} parent=1 // pred_fallthru
      _
    // Predicated region
    $region50: #{q_function_forward.1} parent=1 // pred_check
      _
    $region51: #{q_function_forward.1} parent=1 // pred_check_branch
      %93 = sbr.rel (0) target = $region53
    $region52: #{q_function_forward.1} parent=1 // pred_region
      %94 = dma.done [#allocation7], 128
    $region53: #{q_function_forward.1} parent=1 // pred_fallthru
      _
    // Predicated region
    $region54: #{q_function_forward.1} parent=1 // pred_check
      _
    $region55: #{q_function_forward.1} parent=1 // pred_check_branch
      %96 = sbr.rel (0) target = $region57
    $region56: #{q_function_forward.1} parent=1 // pred_region
      %97 = dma.done [#allocation7], 384
    $region57: #{q_function_forward.1} parent=1 // pred_fallthru
      _
    // Predicated region
    $region58: #{q_function_forward.1} parent=1 // pred_check
      _
    $region59: #{q_function_forward.1} parent=1 // pred_check_branch
      %99 = sbr.rel (0) target = $region61
    $region60: #{q_function_forward.1} parent=1 // pred_region
      %100 = dma.done [#allocation10], 4096
    $region61: #{q_function_forward.1} parent=1 // pred_fallthru
      _
    // Predicated region
    $region62: #{q_function_forward.1} parent=1 // pred_check
      _
    $region63: #{q_function_forward.1} parent=1 // pred_check_branch
      %102 = sbr.rel (0) target = $region65
    $region64: #{q_function_forward.1} parent=1 // pred_region
      %103 = dma.done [#allocation10], 4096
    $region65: #{q_function_forward.1} parent=1 // pred_fallthru
      _
    %v105 = vld [vmem:[#allocation3] sm:$0xff]
    %v106 = vpack.c.bf16 %v105, %v105
    %v107 = vld [vmem:[#allocation8] sm:$0xff]
    %v108 = vld [vmem:[#allocation8 + $0x8] sm:$0xff]
    %v109 = vld [vmem:[#allocation8 + $0x10] sm:$0x11]
    %v110 = vld [vmem:[#allocation6] sm:$0xff]
    %v111 = vpack.c.bf16 %v110, %v110
    %v112 = vld [vmem:[%s3] sm:$0x77]
    %v114 = vunpack.c.l.b16 %v112
    %v115 = vunpack.c.h.b16 %v112
    %v116 = vpack.c.b16 %v114, %v114
    %v117 = vpack.c.b16 %v115, %v115
    %vm118 = vcmask 48128
    %v120 = vsel %vm118, %v111, 0
    %vm122 = vcmask 1042432
    %v124 = vsel %vm122, %v116, 0
    %v127 = vsel %vm122, %v117, 0
    %129 = vmatprep.subr.bf16.mxu0 %v127
    %130 = vmatpush1.bf16.msra.mxu0 %v124
    %131 = vmatprep.subr.bf16.mxu0 0
    %132 = vmatpush1.bf16.msra.mxu0 0
    %133 = vmatprep.subr.bf16.mxu0 0
    %134 = vmatpush1.bf16.msra.mxu0 0
    %135 = vmatprep.subr.bf16.mxu0 0
    %136 = vmatpush1.bf16.msra.mxu0 0
    %137 = vmatprep.subr.bf16.mxu0 0
    %138 = vmatpush1.bf16.msra.mxu0 0
    %139 = vmatprep.subr.bf16.mxu0 0
    %140 = vmatpush1.bf16.msra.mxu0 0
    %141 = vmatprep.subr.bf16.mxu0 0
    %142 = vmatpush1.bf16.msra.mxu0 0
    %143 = vmatprep.subr.bf16.mxu0 0
    %144 = vmatpush1.bf16.msra.mxu0 0
    %145 = vmatprep.subr.bf16.mxu0 0
    %146 = vmatpush1.bf16.msra.mxu0 0
    %147 = vmatprep.subr.bf16.mxu0 0
    %148 = vmatpush1.bf16.msra.mxu0 0
    %149 = vmatprep.subr.bf16.mxu0 0
    %150 = vmatpush1.bf16.msra.mxu0 0
    %151 = vmatprep.subr.bf16.mxu0 0
    %152 = vmatpush1.bf16.msra.mxu0 0
    %153 = vmatprep.subr.bf16.mxu0 0
    %154 = vmatpush1.bf16.msra.mxu0 0
    %155 = vmatprep.subr.bf16.mxu0 0
    %156 = vmatpush1.bf16.msra.mxu0 0
    %157 = vmatprep.subr.bf16.mxu0 0
    %158 = vmatpush1.bf16.msra.mxu0 0
    %159 = vmatprep.subr.bf16.mxu0 0
    %160 = vmatpush1.bf16.msra.mxu0 0
    %161 = vmatprep.mubr.bf16.mxu0 0
    %162 = vmatmul.mubr.bf16.gmra.mrb[0].mxu0 %v120
    %v163 = vpop.f32.mrb[0].mxu0
    %v164 = vadd.f32 0.0, %v163
    %v165 = vpop.f32.mrb[0].mxu0
    %v166 = vadd.f32 0.0, %v165
    %v167 = vpop.f32.mrb[0].mxu0
    %v168 = vpop.f32.mrb[0].mxu0
    %169 = vdwg.mxu0
    %v173 = vunpack.c.l.b16 %v107
    %v174 = vunpack.c.h.b16 %v107
    %v175 = vunpack.c.l.b16 %v108
    %v176 = vunpack.c.h.b16 %v108
    %v177 = vunpack.c.l.b16 %v109
    %v178 = vunpack.c.h.b16 %v109
    %v179 = vpack.c.b16 %v175, %v173
    %v180 = vpack.c.b16 %v176, %v174
    %v181 = vpack.c.b16 %v177, %v177
    %v182 = vpack.c.b16 %v178, %v178
    %vm185 = vcmask 138240
    %v187 = vsel %vm185, %v106, 0
    %vm189 = vcmask 1040384
    %v190 = vsel 0, 4294967295, 65535
    %v191 = vsel %vm189, %v190, 0
    %v193 = vand.u32 %v181, %v191
    %v196 = vand.u32 %v182, %v191
    %198 = vmatprep.subr.bf16.mxu0 %v180
    %199 = vmatpush1.bf16.msra.mxu0 %v179
    %200 = vmatprep.subr.bf16.mxu0 %v196
    %201 = vmatpush1.bf16.msra.mxu0 %v193
    %202 = vmatprep.subr.bf16.mxu0 0
    %203 = vmatpush1.bf16.msra.mxu0 0
    %204 = vmatprep.subr.bf16.mxu0 0
    %205 = vmatpush1.bf16.msra.mxu0 0
    %206 = vmatprep.subr.bf16.mxu0 0
    %207 = vmatpush1.bf16.msra.mxu0 0
    %208 = vmatprep.subr.bf16.mxu0 0
    %209 = vmatpush1.bf16.msra.mxu0 0
    %210 = vmatprep.subr.bf16.mxu0 0
    %211 = vmatpush1.bf16.msra.mxu0 0
    %212 = vmatprep.subr.bf16.mxu0 0
    %213 = vmatpush1.bf16.msra.mxu0 0
    %214 = vmatprep.subr.bf16.mxu0 0
    %215 = vmatpush1.bf16.msra.mxu0 0
    %216 = vmatprep.subr.bf16.mxu0 0
    %217 = vmatpush1.bf16.msra.mxu0 0
    %218 = vmatprep.subr.bf16.mxu0 0
    %219 = vmatpush1.bf16.msra.mxu0 0
    %220 = vmatprep.subr.bf16.mxu0 0
    %221 = vmatpush1.bf16.msra.mxu0 0
    %222 = vmatprep.subr.bf16.mxu0 0
    %223 = vmatpush1.bf16.msra.mxu0 0
    %224 = vmatprep.subr.bf16.mxu0 0
    %225 = vmatpush1.bf16.msra.mxu0 0
    %226 = vmatprep.subr.bf16.mxu0 0
    %227 = vmatpush1.bf16.msra.mxu0 0
    %228 = vmatprep.subr.bf16.mxu0 0
    %229 = vmatpush1.bf16.msra.mxu0 0
    %230 = vmatprep.mubr.bf16.mxu0 0
    %231 = vmatmul.mubr.bf16.gmra.mrb[0].mxu0 %v187
    %v232 = vpop.f32.mrb[0].mxu0
    %v233 = vadd.f32 %v164, %v232
    %v234 = vpop.f32.mrb[0].mxu0
    %v235 = vadd.f32 %v166, %v234
    %v236 = vpop.f32.mrb[0].mxu0
    %v237 = vpop.f32.mrb[0].mxu0
    %238 = vdwg.mxu0
    %v239 = vld [vmem:[%s4] sm:$0x3]
    %v241 = vlaneseq
    %v242 = vshrl.u32 %v241, 7
    %v243 = vsub.s32 0, %v242
    %v244 = vrot.slane %v239, %v243
    %v245 = vlaneseq
    %v246 = vshrl.u32 %v245, 7
    %v247 = vsub.s32 1, %v246
    %v248 = vrot.slane %v239, %v247
    %v251 = vadd.f32 %v233, %v244
    %v252 = vadd.f32 %v235, %v248
    %v253 = vmax.f32 %v251, 0.0
    %v254 = vmax.f32 %v252, 0.0
    %v255 = vpack.c.bf16 %v253, %v253
    %v256 = vpack.c.bf16 %v254, %v254
    %v257 = vld [vmem:[#allocation9] sm:$0xff]
    %v258 = vld [vmem:[#allocation9 + $0x8] sm:$0xff]
    %v259 = vld [vmem:[#allocation9 + $0x10] sm:$0xff]
    %v260 = vld [vmem:[#allocation9 + $0x18] sm:$0xff]
    %v261 = vld [vmem:[#allocation9 + $0x20] sm:$0xff]
    %v262 = vld [vmem:[#allocation9 + $0x28] sm:$0xff]
    %v263 = vld [vmem:[#allocation9 + $0x30] sm:$0xff]
    %v264 = vld [vmem:[#allocation9 + $0x38] sm:$0xff]
    %v265 = vld [vmem:[#allocation9 + $0x40] sm:$0xff]
    %v266 = vld [vmem:[#allocation9 + $0x48] sm:$0xff]
    %v267 = vld [vmem:[#allocation9 + $0x50] sm:$0xff]
    %v268 = vld [vmem:[#allocation9 + $0x58] sm:$0xff]
    %v269 = vld [vmem:[#allocation9 + $0x60] sm:$0xff]
    %v270 = vld [vmem:[#allocation9 + $0x68] sm:$0xff]
    %v271 = vld [vmem:[#allocation9 + $0x70] sm:$0xff]
    %v272 = vld [vmem:[#allocation9 + $0x78] sm:$0xff]
    %v273 = vld [vmem:[#allocation9 + $0x80] sm:$0xff]
    %v274 = vld [vmem:[#allocation9 + $0x88] sm:$0xff]
    %v275 = vld [vmem:[#allocation9 + $0x90] sm:$0xff]
    %v276 = vld [vmem:[#allocation9 + $0x98] sm:$0xff]
    %v277 = vld [vmem:[#allocation9 + $0xa0] sm:$0xff]
    %v278 = vld [vmem:[#allocation9 + $0xa8] sm:$0xff]
    %v279 = vld [vmem:[#allocation9 + $0xb0] sm:$0xff]
    %v280 = vld [vmem:[#allocation9 + $0xb8] sm:$0xff]
    %v281 = vld [vmem:[#allocation9 + $0xc0] sm:$0xff]
    %v282 = vld [vmem:[#allocation9 + $0xc8] sm:$0xff]
    %v283 = vld [vmem:[#allocation9 + $0xd0] sm:$0xff]
    %v284 = vld [vmem:[#allocation9 + $0xd8] sm:$0xff]
    %v285 = vld [vmem:[#allocation9 + $0xe0] sm:$0xff]
    %v286 = vld [vmem:[#allocation9 + $0xe8] sm:$0xff]
    %v287 = vld [vmem:[#allocation9 + $0xf0] sm:$0xff]
    %v288 = vld [vmem:[#allocation9 + $0xf8] sm:$0xff]
    %v289 = vld [vmem:[%s6] sm:$0x3]
    %v291 = vlaneseq
    %v292 = vshrl.u32 %v291, 7
    %v293 = vsub.s32 0, %v292
    %v294 = vrot.slane %v289, %v293
    %v295 = vlaneseq
    %v296 = vshrl.u32 %v295, 7
    %v297 = vsub.s32 1, %v296
    %v298 = vrot.slane %v289, %v297
    %v333 = vunpack.c.l.b16 %v257
    %v334 = vunpack.c.h.b16 %v257
    %v335 = vunpack.c.l.b16 %v258
    %v336 = vunpack.c.h.b16 %v258
    %v337 = vunpack.c.l.b16 %v259
    %v338 = vunpack.c.h.b16 %v259
    %v339 = vunpack.c.l.b16 %v260
    %v340 = vunpack.c.h.b16 %v260
    %v341 = vunpack.c.l.b16 %v261
    %v342 = vunpack.c.h.b16 %v261
    %v343 = vunpack.c.l.b16 %v262
    %v344 = vunpack.c.h.b16 %v262
    %v345 = vunpack.c.l.b16 %v263
    %v346 = vunpack.c.h.b16 %v263
    %v347 = vunpack.c.l.b16 %v264
    %v348 = vunpack.c.h.b16 %v264
    %v349 = vunpack.c.l.b16 %v265
    %v350 = vunpack.c.h.b16 %v265
    %v351 = vunpack.c.l.b16 %v266
    %v352 = vunpack.c.h.b16 %v266
    %v353 = vunpack.c.l.b16 %v267
    %v354 = vunpack.c.h.b16 %v267
    %v355 = vunpack.c.l.b16 %v268
    %v356 = vunpack.c.h.b16 %v268
    %v357 = vunpack.c.l.b16 %v269
    %v358 = vunpack.c.h.b16 %v269
    %v359 = vunpack.c.l.b16 %v270
    %v360 = vunpack.c.h.b16 %v270
    %v361 = vunpack.c.l.b16 %v271
    %v362 = vunpack.c.h.b16 %v271
    %v363 = vunpack.c.l.b16 %v272
    %v364 = vunpack.c.h.b16 %v272
    %v365 = vunpack.c.l.b16 %v273
    %v366 = vunpack.c.h.b16 %v273
    %v367 = vunpack.c.l.b16 %v274
    %v368 = vunpack.c.h.b16 %v274
    %v369 = vunpack.c.l.b16 %v275
    %v370 = vunpack.c.h.b16 %v275
    %v371 = vunpack.c.l.b16 %v276
    %v372 = vunpack.c.h.b16 %v276
    %v373 = vunpack.c.l.b16 %v277
    %v374 = vunpack.c.h.b16 %v277
    %v375 = vunpack.c.l.b16 %v278
    %v376 = vunpack.c.h.b16 %v278
    %v377 = vunpack.c.l.b16 %v279
    %v378 = vunpack.c.h.b16 %v279
    %v379 = vunpack.c.l.b16 %v280
    %v380 = vunpack.c.h.b16 %v280
    %v381 = vunpack.c.l.b16 %v281
    %v382 = vunpack.c.h.b16 %v281
    %v383 = vunpack.c.l.b16 %v282
    %v384 = vunpack.c.h.b16 %v282
    %v385 = vunpack.c.l.b16 %v283
    %v386 = vunpack.c.h.b16 %v283
    %v387 = vunpack.c.l.b16 %v284
    %v388 = vunpack.c.h.b16 %v284
    %v389 = vunpack.c.l.b16 %v285
    %v390 = vunpack.c.h.b16 %v285
    %v391 = vunpack.c.l.b16 %v286
    %v392 = vunpack.c.h.b16 %v286
    %v393 = vunpack.c.l.b16 %v287
    %v394 = vunpack.c.h.b16 %v287
    %v395 = vunpack.c.l.b16 %v288
    %v396 = vunpack.c.h.b16 %v288
    %v397 = vpack.c.b16 %v335, %v333
    %v398 = vpack.c.b16 %v336, %v334
    %v399 = vpack.c.b16 %v339, %v337
    %v400 = vpack.c.b16 %v340, %v338
    %v401 = vpack.c.b16 %v343, %v341
    %v402 = vpack.c.b16 %v344, %v342
    %v403 = vpack.c.b16 %v347, %v345
    %v404 = vpack.c.b16 %v348, %v346
    %v405 = vpack.c.b16 %v351, %v349
    %v406 = vpack.c.b16 %v352, %v350
    %v407 = vpack.c.b16 %v355, %v353
    %v408 = vpack.c.b16 %v356, %v354
    %v409 = vpack.c.b16 %v359, %v357
    %v410 = vpack.c.b16 %v360, %v358
    %v411 = vpack.c.b16 %v363, %v361
    %v412 = vpack.c.b16 %v364, %v362
    %v413 = vpack.c.b16 %v367, %v365
    %v414 = vpack.c.b16 %v368, %v366
    %v415 = vpack.c.b16 %v371, %v369
    %v416 = vpack.c.b16 %v372, %v370
    %v417 = vpack.c.b16 %v375, %v373
    %v418 = vpack.c.b16 %v376, %v374
    %v419 = vpack.c.b16 %v379, %v377
    %v420 = vpack.c.b16 %v380, %v378
    %v421 = vpack.c.b16 %v383, %v381
    %v422 = vpack.c.b16 %v384, %v382
    %v423 = vpack.c.b16 %v387, %v385
    %v424 = vpack.c.b16 %v388, %v386
    %v425 = vpack.c.b16 %v391, %v389
    %v426 = vpack.c.b16 %v392, %v390
    %v427 = vpack.c.b16 %v395, %v393
    %v428 = vpack.c.b16 %v396, %v394
    %461 = vmatprep.subr.bf16.mxu0 %v398
    %462 = vmatpush1.bf16.msra.mxu0 %v397
    %463 = vmatprep.subr.bf16.mxu0 %v400
    %464 = vmatpush1.bf16.msra.mxu0 %v399
    %465 = vmatprep.subr.bf16.mxu0 %v402
    %466 = vmatpush1.bf16.msra.mxu0 %v401
    %467 = vmatprep.subr.bf16.mxu0 %v404
    %468 = vmatpush1.bf16.msra.mxu0 %v403
    %469 = vmatprep.subr.bf16.mxu0 %v406
    %470 = vmatpush1.bf16.msra.mxu0 %v405
    %471 = vmatprep.subr.bf16.mxu0 %v408
    %472 = vmatpush1.bf16.msra.mxu0 %v407
    %473 = vmatprep.subr.bf16.mxu0 %v410
    %474 = vmatpush1.bf16.msra.mxu0 %v409
    %475 = vmatprep.subr.bf16.mxu0 %v412
    %476 = vmatpush1.bf16.msra.mxu0 %v411
    %477 = vmatprep.subr.bf16.mxu0 %v414
    %478 = vmatpush1.bf16.msra.mxu0 %v413
    %479 = vmatprep.subr.bf16.mxu0 %v416
    %480 = vmatpush1.bf16.msra.mxu0 %v415
    %481 = vmatprep.subr.bf16.mxu0 %v418
    %482 = vmatpush1.bf16.msra.mxu0 %v417
    %483 = vmatprep.subr.bf16.mxu0 %v420
    %484 = vmatpush1.bf16.msra.mxu0 %v419
    %485 = vmatprep.subr.bf16.mxu0 %v422
    %486 = vmatpush1.bf16.msra.mxu0 %v421
    %487 = vmatprep.subr.bf16.mxu0 %v424
    %488 = vmatpush1.bf16.msra.mxu0 %v423
    %489 = vmatprep.subr.bf16.mxu0 %v426
    %490 = vmatpush1.bf16.msra.mxu0 %v425
    %491 = vmatprep.subr.bf16.mxu0 %v428
    %492 = vmatpush1.bf16.msra.mxu0 %v427
    %493 = vmatprep.mubr.bf16.mxu0 %v256
    %494 = vmatmul.mubr.bf16.gmra.mrb[0].mxu0 %v255
    %v495 = vpop.f32.mrb[0].mxu0
    %v496 = vadd.f32 %v294, %v495
    %v497 = vpop.f32.mrb[0].mxu0
    %v498 = vadd.f32 %v298, %v497
    %v499 = vpop.f32.mrb[0].mxu0
    %v500 = vpop.f32.mrb[0].mxu0
    %501 = vdwg.mxu0
    %v502 = vmax.f32 %v496, 0.0
    %v503 = vmax.f32 %v498, 0.0
    %v504 = vpack.c.bf16 %v502, %v502
    %v505 = vpack.c.bf16 %v503, %v503
    %v506 = vld [vmem:[#allocation11] sm:$0xff]
    %v507 = vld [vmem:[#allocation11 + $0x8] sm:$0xff]
    %v508 = vld [vmem:[#allocation11 + $0x10] sm:$0xff]
    %v509 = vld [vmem:[#allocation11 + $0x18] sm:$0xff]
    %v510 = vld [vmem:[#allocation11 + $0x20] sm:$0xff]
    %v511 = vld [vmem:[#allocation11 + $0x28] sm:$0xff]
    %v512 = vld [vmem:[#allocation11 + $0x30] sm:$0xff]
    %v513 = vld [vmem:[#allocation11 + $0x38] sm:$0xff]
    %v514 = vld [vmem:[#allocation11 + $0x40] sm:$0xff]
    %v515 = vld [vmem:[#allocation11 + $0x48] sm:$0xff]
    %v516 = vld [vmem:[#allocation11 + $0x50] sm:$0xff]
    %v517 = vld [vmem:[#allocation11 + $0x58] sm:$0xff]
    %v518 = vld [vmem:[#allocation11 + $0x60] sm:$0xff]
    %v519 = vld [vmem:[#allocation11 + $0x68] sm:$0xff]
    %v520 = vld [vmem:[#allocation11 + $0x70] sm:$0xff]
    %v521 = vld [vmem:[#allocation11 + $0x78] sm:$0xff]
    %v522 = vld [vmem:[#allocation11 + $0x80] sm:$0xff]
    %v523 = vld [vmem:[#allocation11 + $0x88] sm:$0xff]
    %v524 = vld [vmem:[#allocation11 + $0x90] sm:$0xff]
    %v525 = vld [vmem:[#allocation11 + $0x98] sm:$0xff]
    %v526 = vld [vmem:[#allocation11 + $0xa0] sm:$0xff]
    %v527 = vld [vmem:[#allocation11 + $0xa8] sm:$0xff]
    %v528 = vld [vmem:[#allocation11 + $0xb0] sm:$0xff]
    %v529 = vld [vmem:[#allocation11 + $0xb8] sm:$0xff]
    %v530 = vld [vmem:[#allocation11 + $0xc0] sm:$0xff]
    %v531 = vld [vmem:[#allocation11 + $0xc8] sm:$0xff]
    %v532 = vld [vmem:[#allocation11 + $0xd0] sm:$0xff]
    %v533 = vld [vmem:[#allocation11 + $0xd8] sm:$0xff]
    %v534 = vld [vmem:[#allocation11 + $0xe0] sm:$0xff]
    %v535 = vld [vmem:[#allocation11 + $0xe8] sm:$0xff]
    %v536 = vld [vmem:[#allocation11 + $0xf0] sm:$0xff]
    %v537 = vld [vmem:[#allocation11 + $0xf8] sm:$0xff]
    %v538 = vld [vmem:[%s8] sm:$0x3]
    %v540 = vlaneseq
    %v541 = vshrl.u32 %v540, 7
    %v542 = vsub.s32 0, %v541
    %v543 = vrot.slane %v538, %v542
    %v544 = vlaneseq
    %v545 = vshrl.u32 %v544, 7
    %v546 = vsub.s32 1, %v545
    %v547 = vrot.slane %v538, %v546
    %v582 = vunpack.c.l.b16 %v506
    %v583 = vunpack.c.h.b16 %v506
    %v584 = vunpack.c.l.b16 %v507
    %v585 = vunpack.c.h.b16 %v507
    %v586 = vunpack.c.l.b16 %v508
    %v587 = vunpack.c.h.b16 %v508
    %v588 = vunpack.c.l.b16 %v509
    %v589 = vunpack.c.h.b16 %v509
    %v590 = vunpack.c.l.b16 %v510
    %v591 = vunpack.c.h.b16 %v510
    %v592 = vunpack.c.l.b16 %v511
    %v593 = vunpack.c.h.b16 %v511
    %v594 = vunpack.c.l.b16 %v512
    %v595 = vunpack.c.h.b16 %v512
    %v596 = vunpack.c.l.b16 %v513
    %v597 = vunpack.c.h.b16 %v513
    %v598 = vunpack.c.l.b16 %v514
    %v599 = vunpack.c.h.b16 %v514
    %v600 = vunpack.c.l.b16 %v515
    %v601 = vunpack.c.h.b16 %v515
    %v602 = vunpack.c.l.b16 %v516
    %v603 = vunpack.c.h.b16 %v516
    %v604 = vunpack.c.l.b16 %v517
    %v605 = vunpack.c.h.b16 %v517
    %v606 = vunpack.c.l.b16 %v518
    %v607 = vunpack.c.h.b16 %v518
    %v608 = vunpack.c.l.b16 %v519
    %v609 = vunpack.c.h.b16 %v519
    %v610 = vunpack.c.l.b16 %v520
    %v611 = vunpack.c.h.b16 %v520
    %v612 = vunpack.c.l.b16 %v521
    %v613 = vunpack.c.h.b16 %v521
    %v614 = vunpack.c.l.b16 %v522
    %v615 = vunpack.c.h.b16 %v522
    %v616 = vunpack.c.l.b16 %v523
    %v617 = vunpack.c.h.b16 %v523
    %v618 = vunpack.c.l.b16 %v524
    %v619 = vunpack.c.h.b16 %v524
    %v620 = vunpack.c.l.b16 %v525
    %v621 = vunpack.c.h.b16 %v525
    %v622 = vunpack.c.l.b16 %v526
    %v623 = vunpack.c.h.b16 %v526
    %v624 = vunpack.c.l.b16 %v527
    %v625 = vunpack.c.h.b16 %v527
    %v626 = vunpack.c.l.b16 %v528
    %v627 = vunpack.c.h.b16 %v528
    %v628 = vunpack.c.l.b16 %v529
    %v629 = vunpack.c.h.b16 %v529
    %v630 = vunpack.c.l.b16 %v530
    %v631 = vunpack.c.h.b16 %v530
    %v632 = vunpack.c.l.b16 %v531
    %v633 = vunpack.c.h.b16 %v531
    %v634 = vunpack.c.l.b16 %v532
    %v635 = vunpack.c.h.b16 %v532
    %v636 = vunpack.c.l.b16 %v533
    %v637 = vunpack.c.h.b16 %v533
    %v638 = vunpack.c.l.b16 %v534
    %v639 = vunpack.c.h.b16 %v534
    %v640 = vunpack.c.l.b16 %v535
    %v641 = vunpack.c.h.b16 %v535
    %v642 = vunpack.c.l.b16 %v536
    %v643 = vunpack.c.h.b16 %v536
    %v644 = vunpack.c.l.b16 %v537
    %v645 = vunpack.c.h.b16 %v537
    %v646 = vpack.c.b16 %v584, %v582
    %v647 = vpack.c.b16 %v585, %v583
    %v648 = vpack.c.b16 %v588, %v586
    %v649 = vpack.c.b16 %v589, %v587
    %v650 = vpack.c.b16 %v592, %v590
    %v651 = vpack.c.b16 %v593, %v591
    %v652 = vpack.c.b16 %v596, %v594
    %v653 = vpack.c.b16 %v597, %v595
    %v654 = vpack.c.b16 %v600, %v598
    %v655 = vpack.c.b16 %v601, %v599
    %v656 = vpack.c.b16 %v604, %v602
    %v657 = vpack.c.b16 %v605, %v603
    %v658 = vpack.c.b16 %v608, %v606
    %v659 = vpack.c.b16 %v609, %v607
    %v660 = vpack.c.b16 %v612, %v610
    %v661 = vpack.c.b16 %v613, %v611
    %v662 = vpack.c.b16 %v616, %v614
    %v663 = vpack.c.b16 %v617, %v615
    %v664 = vpack.c.b16 %v620, %v618
    %v665 = vpack.c.b16 %v621, %v619
    %v666 = vpack.c.b16 %v624, %v622
    %v667 = vpack.c.b16 %v625, %v623
    %v668 = vpack.c.b16 %v628, %v626
    %v669 = vpack.c.b16 %v629, %v627
    %v670 = vpack.c.b16 %v632, %v630
    %v671 = vpack.c.b16 %v633, %v631
    %v672 = vpack.c.b16 %v636, %v634
    %v673 = vpack.c.b16 %v637, %v635
    %v674 = vpack.c.b16 %v640, %v638
    %v675 = vpack.c.b16 %v641, %v639
    %v676 = vpack.c.b16 %v644, %v642
    %v677 = vpack.c.b16 %v645, %v643
    %710 = vmatprep.subr.bf16.mxu0 %v647
    %711 = vmatpush1.bf16.msra.mxu0 %v646
    %712 = vmatprep.subr.bf16.mxu0 %v649
    %713 = vmatpush1.bf16.msra.mxu0 %v648
    %714 = vmatprep.subr.bf16.mxu0 %v651
    %715 = vmatpush1.bf16.msra.mxu0 %v650
    %716 = vmatprep.subr.bf16.mxu0 %v653
    %717 = vmatpush1.bf16.msra.mxu0 %v652
    %718 = vmatprep.subr.bf16.mxu0 %v655
    %719 = vmatpush1.bf16.msra.mxu0 %v654
    %720 = vmatprep.subr.bf16.mxu0 %v657
    %721 = vmatpush1.bf16.msra.mxu0 %v656
    %722 = vmatprep.subr.bf16.mxu0 %v659
    %723 = vmatpush1.bf16.msra.mxu0 %v658
    %724 = vmatprep.subr.bf16.mxu0 %v661
    %725 = vmatpush1.bf16.msra.mxu0 %v660
    %726 = vmatprep.subr.bf16.mxu0 %v663
    %727 = vmatpush1.bf16.msra.mxu0 %v662
    %728 = vmatprep.subr.bf16.mxu0 %v665
    %729 = vmatpush1.bf16.msra.mxu0 %v664
    %730 = vmatprep.subr.bf16.mxu0 %v667
    %731 = vmatpush1.bf16.msra.mxu0 %v666
    %732 = vmatprep.subr.bf16.mxu0 %v669
    %733 = vmatpush1.bf16.msra.mxu0 %v668
    %734 = vmatprep.subr.bf16.mxu0 %v671
    %735 = vmatpush1.bf16.msra.mxu0 %v670
    %736 = vmatprep.subr.bf16.mxu0 %v673
    %737 = vmatpush1.bf16.msra.mxu0 %v672
    %738 = vmatprep.subr.bf16.mxu0 %v675
    %739 = vmatpush1.bf16.msra.mxu0 %v674
    %740 = vmatprep.subr.bf16.mxu0 %v677
    %741 = vmatpush1.bf16.msra.mxu0 %v676
    %742 = vmatprep.mubr.bf16.mxu0 %v505
    %743 = vmatmul.mubr.bf16.gmra.mrb[0].mxu0 %v504
    %v744 = vpop.f32.mrb[0].mxu0
    %v745 = vadd.f32 %v543, %v744
    %v746 = vpop.f32.mrb[0].mxu0
    %v747 = vadd.f32 %v547, %v746
    %v748 = vpop.f32.mrb[0].mxu0
    %v749 = vpop.f32.mrb[0].mxu0
    %750 = vdwg.mxu0
    %v751 = vmax.f32 %v745, 0.0
    %v752 = vmax.f32 %v747, 0.0
    %v753 = vld [vmem:[%s9] sm:$0x3]
    %v755 = vlaneseq
    %v756 = vshrl.u32 %v755, 7
    %v757 = vsub.s32 0, %v756
    %v758 = vrot.slane %v753, %v757
    %v759 = vlaneseq
    %v760 = vshrl.u32 %v759, 7
    %v761 = vsub.s32 1, %v760
    %v762 = vrot.slane %v753, %v761
    %v765 = vmul.f32 %v751, %v758
    %v766 = vmul.f32 %v752, %v762
    %v767 = vadd.f32 %v765, %v766
    %768 = vadd.xlane.f32.xlu0 %v767
    %v769 = vpop.xlane.xlu0 %768
    %s770 = sld [smem:[#allocation2]]
    %v771 = vstv %s770
    %v772 = vadd.f32 %v769, %v771
    %v774 = vlaneseq
    %v775 = vand.u32 %v774, 127
    %v776 = vlaneseq
    %v777 = vshrl.u32 %v776, 7
    %v778 = vsub.s32 %v775, %v777
    %v779 = vrot.slane %v772, %v778
    %vm781 = vcmask 57344
    %782 = vst.msk [vmem:[#allocation12] sm:$0x1] %vm781, %v779
    // Predicated region
    $region66: #{q_function_forward.1} parent=1 // pred_check
      _
    $region67: #{q_function_forward.1} parent=1 // pred_check_branch
      %784 = sbr.rel (0) target = $region69
    $region68: #{q_function_forward.1} parent=1 // pred_region
      %s786 = ssub.s32 16, 16
      %787 = vsyncadd [#allocation5], %s786
      %s789 = sshll.u32 [#allocation12], 4
      %s790 = int_to_ptr.vmem [resolvable:$true] %s789
      %792 = dma.vmem_to_hbm [thread:$0]  %s790, 16, %s11, [#allocation5]
    $region69: #{q_function_forward.1} parent=1 // pred_fallthru
      _
    // Predicated region
    $region70: #{q_function_forward.1} parent=1 // pred_check
      _
    $region71: #{q_function_forward.1} parent=1 // pred_check_branch
      %794 = sbr.rel (0) target = $region73
    $region72: #{q_function_forward.1} parent=1 // pred_region
      %795 = dma.done [#allocation5], 16
    $region73: #{q_function_forward.1} parent=1 // pred_fallthru
      _
    %796 = vsyncpa [#allocation4], 1
    %797 = vsyncpa [#allocation7], 1
    %798 = vsyncpa [#allocation10], 1
    %799 = vsyncpa [#allocation5], 1

</llo_original>
